<compile_context>
chip_gen: v6e
topology: v6e:2x2x1
jax: 0.10.0
libtpu: 0.0.40
codegen_flags: <defaults>
</compile_context>

<pallas_src>
import jax
import jax.numpy as jnp
from jax.experimental import pallas as pl
from jax.experimental.pallas import tpu as pltpu

_SINGLE_STEP_MAX_BATCH = 512   # below this, one grid step beats tiling


def _round_up(n, m):
    return ((n + m - 1) // m) * m


def _default_batch_tile():
    """Generation-matched batch tile for the large-batch tiled path.

    v5e MXU passes are 128 rows (4x128x128); v6e/v7x are 256 rows (2x256x256).
    """
    try:
        kind = jax.devices()[0].device_kind.lower()
    except Exception:  # pragma: no cover - defensive only
        kind = ""
    return 128 if "v5" in kind else 256


def _softplus(x):
    # Numerically-stable softplus (matches torch.nn.Softplus, beta=1), f32.
    return jnp.maximum(x, 0.0) + jnp.log1p(jnp.exp(-jnp.abs(x)))


def mlp_kernel(x_ref, w1_ref, b1_ref, w2_ref, b2_ref, out_ref):
    # f32 -> bf16 cast happens here (in VMEM), not as a host-side copy.
    x = x_ref[...].astype(w1_ref.dtype)
    # Hidden layer: bf16 operands on the MXU, f32 accumulation.
    h = jnp.dot(x, w1_ref[...], preferred_element_type=jnp.float32)
    h = _softplus(h + b1_ref[...])                      # f32 VPU/EUP
    # Output head (output_nonlinearity=[None] -> no activation).
    o = jnp.dot(h.astype(w2_ref.dtype), w2_ref[...],
                preferred_element_type=jnp.float32)
    out_ref[...] = (o + b2_ref[...]).astype(out_ref.dtype)


def prepare_params(w1, b1, w2, b2, compute_dtype=jnp.bfloat16):
    """One-time parameter prep (cast/reshape) hoisted out of the forward pass."""
    return (w1.astype(compute_dtype),
            jnp.reshape(b1, (1, -1)).astype(jnp.float32),
            w2.astype(compute_dtype),
            jnp.reshape(b2, (1, -1)).astype(jnp.float32))


def mlp_forward(x, w1c, b1c, w2c, b2c, *, batch_tile=None):
    """Fused MLP forward: softplus(x @ w1 + b1) @ w2 + b2.

    x: (B, D_in) f32; w1c/w2c bf16 (from prepare_params), b1c/b2c f32 (1, ·).
    Returns (B, D_out) in x.dtype.
    """
    B, D_in = x.shape
    H = w1c.shape[1]
    D_out = w2c.shape[1]

    if batch_tile is None:
        batch_tile = _default_batch_tile()

    if B <= _SINGLE_STEP_MAX_BATCH:
        # Single grid step: every block equals the full array dims, so there is
        # no (8,128) constraint, no batch padding and no post-kernel slice.
        tb, bp = B, B
    else:
        # Pipelined, megacore-parallel batch grid with generation-matched tiles.
        tb = batch_tile
        bp = _round_up(B, tb)

    grid = (bp // tb,)
    xp = x if bp == B else jnp.zeros((bp, D_in), x.dtype).at[:B].set(x)

    # VMEM per step (easily fits the 16/32 MiB scoped defaults at these sizes):
    #   2*tb*D_in*4B (x, double-buffered f32) + 2*tb*D_out*4B (out)
    #   + 2*(D_in*H + H*D_out)*2B (resident bf16 weights, constant index maps)
    #   + tb*H*4B (f32 hidden intermediate).
    out = pl.pallas_call(
        mlp_kernel,
        out_shape=jax.ShapeDtypeStruct((bp, D_out), x.dtype),
        grid_spec=pltpu.PrefetchScalarGridSpec(
            num_scalar_prefetch=0,
            grid=grid,
            in_specs=[
                # Activations: tiled along the batch grid (auto double-buffered).
                # Last dim = full D_in (no host-side lane padding needed).
                pl.BlockSpec((tb, D_in), lambda i: (i, 0)),
                # Weights / biases: constant index maps -> fetched once and
                # kept resident in VMEM, no re-DMA per batch tile.
                pl.BlockSpec((D_in, H), lambda i: (0, 0)),
                pl.BlockSpec((1, H), lambda i: (0, 0)),
                pl.BlockSpec((H, D_out), lambda i: (0, 0)),
                pl.BlockSpec((1, D_out), lambda i: (0, 0)),
            ],
            # Unpadded output: last dim = full D_out, so no 8x-padded f32 slab
            # and no extra writeback bytes (kernel is DMA/overhead-bound here).
            out_specs=pl.BlockSpec((tb, D_out), lambda i: (i, 0)),
        ),
        compiler_params=pltpu.CompilerParams(
            # Batch tiles are independent -> shard across both TCs on v7x.
            dimension_semantics=("parallel",)),
    )(xp, w1c, b1c, w2c, b2c)

    return out if bp == B else out[:B]


def init_linear(key, fan_in, fan_out, dtype=jnp.float32):
    # Deterministic init mimicking torch.nn.Linear default (uniform +-1/sqrt(fan_in)).
    kw, kb = jax.random.split(key)
    bound = 1.0 / jnp.sqrt(jnp.asarray(fan_in, dtype))
    w = jax.random.uniform(kw, (fan_in, fan_out), dtype, -bound, bound)
    b = jax.random.uniform(kb, (1, fan_out), dtype, -bound, bound)
    return w, b


def mlp_reference(x, w1, b1, w2, b2):
    h = jax.nn.softplus(x @ w1 + b1)
    return h @ w2 + b2


if __name__ == "__main__":
    # Shapes consistent with MLP(dim_input=32, dim_output=16, hidden_layers=[128],
    # output_nonlinearity=[None]) -> a single output head.
    B, D_in, H, D_out = 64, 32, 128, 16

    key = jax.random.PRNGKey(0)
    kx, k1, k2, kxl = jax.random.split(key, 4)

    x = jax.random.normal(kx, (B, D_in), jnp.float32)
    w1, b1 = init_linear(k1, D_in, H)
    w2, b2 = init_linear(k2, H, D_out)

    # One-time parameter prep (bf16 cast / bias reshape), outside the forward.
    params = prepare_params(w1, b1, w2, b2)

    fwd = jax.jit(mlp_forward)

    # Small batch -> single-step grid path (no per-tile pipeline overhead).
    # forward() of the module returns a list of outputs (one per head).
    outputs = [fwd(x, *params)]
    jax.block_until_ready(outputs)

    ref = mlp_reference(x, w1, b1, w2, b2)
    assert outputs[0].shape == ref.shape, "shape mismatch vs reference"
    # bf16 MXU operands with f32 accumulation -> loose-but-tight-enough tolerance.
    assert jnp.allclose(outputs[0], ref, atol=5e-2, rtol=5e-2), "mismatch vs reference"

    # Large, non-tile-multiple batch -> exercises the pipelined tiled path
    # (generation-matched 128/256-row tiles, padded grid + post-slice).
    Bl = 1000
    xl = jax.random.normal(kxl, (Bl, D_in), jnp.float32)
    out_l = fwd(xl, *params)
    jax.block_until_ready(out_l)
    ref_l = mlp_reference(xl, w1, b1, w2, b2)
    assert out_l.shape == ref_l.shape, "tiled-path shape mismatch vs reference"
    assert jnp.allclose(out_l, ref_l, atol=5e-2, rtol=5e-2), "tiled-path mismatch"

    print("KERNEL_OK")
</pallas_src>

<mosaic_0001>
module attributes {stable_mosaic.version = 11 : i64} {
  func.func @mlp_kernel(%arg0: i32, %arg1: memref<64x32xf32, #tpu.memory_space<vmem>>, %arg2: memref<32x128xbf16, #tpu.memory_space<vmem>>, %arg3: memref<1x128xf32, #tpu.memory_space<vmem>>, %arg4: memref<128x16xbf16, #tpu.memory_space<vmem>>, %arg5: memref<1x16xf32, #tpu.memory_space<vmem>>, %arg6: memref<64x16xf32, #tpu.memory_space<vmem>>) attributes {dimension_semantics = [#tpu.dimension_semantics<parallel>], iteration_bounds = array<i64: 1>, scalar_prefetch = 0 : i64, scratch_operands = 0 : i64, tpu.core_type = #tpu.core_type<tc>, window_params = [{transform_indices = @transform_0, window_bounds = array<i64: 64, 32>}, {pipeline_mode = #tpu.pipeline_mode<synchronous>, transform_indices = @transform_1, window_bounds = array<i64: 32, 128>}, {pipeline_mode = #tpu.pipeline_mode<synchronous>, transform_indices = @transform_2, window_bounds = array<i64: 1, 128>}, {pipeline_mode = #tpu.pipeline_mode<synchronous>, transform_indices = @transform_3, window_bounds = array<i64: 128, 16>}, {pipeline_mode = #tpu.pipeline_mode<synchronous>, transform_indices = @transform_4, window_bounds = array<i64: 1, 16>}, {transform_indices = @transform_5, window_bounds = array<i64: 64, 16>}]} {
    %c0 = arith.constant 0 : index
    %c0_0 = arith.constant 0 : index
    %0 = vector.load %arg1[%c0, %c0_0] : memref<64x32xf32, #tpu.memory_space<vmem>>, vector<64x32xf32>
    %1 = arith.truncf %0 : vector<64x32xf32> to vector<64x32xbf16>
    %c0_1 = arith.constant 0 : index
    %c0_2 = arith.constant 0 : index
    %2 = vector.load %arg2[%c0_1, %c0_2] : memref<32x128xbf16, #tpu.memory_space<vmem>>, vector<32x128xbf16>
    %cst = arith.constant dense<0.000000e+00> : vector<64x128xf32>
    %3 = tpu.matmul %1, %2, %cst {dimension_numbers = #tpu.dot_dimension_numbers<[1], [0], [0], [1], [0, 0, 1, 1], [], []>} : vector<64x32xbf16>, vector<32x128xbf16>, vector<64x128xf32> -> vector<64x128xf32>
    %c0_3 = arith.constant 0 : index
    %c0_4 = arith.constant 0 : index
    %4 = vector.load %arg3[%c0_3, %c0_4] : memref<1x128xf32, #tpu.memory_space<vmem>>, vector<1x128xf32>
    %5 = vector.broadcast %4 : vector<1x128xf32> to vector<64x128xf32>
    %6 = arith.addf %3, %5 : vector<64x128xf32>
    %cst_5 = arith.constant 0.000000e+00 : f32
    %7 = vector.broadcast %cst_5 : f32 to vector<64x128xf32>
    %8 = arith.maximumf %6, %7 : vector<64x128xf32>
    %9 = math.absf %6 : vector<64x128xf32>
    %cst_6 = arith.constant 0.000000e+00 : f32
    %10 = vector.broadcast %cst_6 : f32 to vector<64x128xf32>
    %11 = arith.subf %10, %9 : vector<64x128xf32>
    %12 = math.exp %11 : vector<64x128xf32>
    %13 = math.log1p %12 : vector<64x128xf32>
    %14 = arith.addf %8, %13 : vector<64x128xf32>
    %15 = arith.truncf %14 : vector<64x128xf32> to vector<64x128xbf16>
    %c0_7 = arith.constant 0 : index
    %c0_8 = arith.constant 0 : index
    %16 = vector.load %arg4[%c0_7, %c0_8] : memref<128x16xbf16, #tpu.memory_space<vmem>>, vector<128x16xbf16>
    %cst_9 = arith.constant dense<0.000000e+00> : vector<64x16xf32>
    %17 = tpu.matmul %15, %16, %cst_9 {dimension_numbers = #tpu.dot_dimension_numbers<[1], [0], [0], [1], [0, 0, 1, 1], [], []>} : vector<64x128xbf16>, vector<128x16xbf16>, vector<64x16xf32> -> vector<64x16xf32>
    %c0_10 = arith.constant 0 : index
    %c0_11 = arith.constant 0 : index
    %18 = vector.load %arg5[%c0_10, %c0_11] : memref<1x16xf32, #tpu.memory_space<vmem>>, vector<1x16xf32>
    %19 = vector.broadcast %18 : vector<1x16xf32> to vector<64x16xf32>
    %20 = arith.addf %17, %19 : vector<64x16xf32>
    %c0_12 = arith.constant 0 : index
    %c0_13 = arith.constant 0 : index
    %21 = vector.load %arg6[%c0_12, %c0_13] : memref<64x16xf32, #tpu.memory_space<vmem>>, vector<64x16xf32>
    tpu.vector_store %arg6[%c0_12, %c0_13], %20 {strides = array<i32>} : memref<64x16xf32, #tpu.memory_space<vmem>>, vector<64x16xf32>,
    return
  }
  func.func @transform_0(%arg0: i32) -> (i32, i32) {
    %c0_i32 = arith.constant 0 : i32
    %c0_i32_0 = arith.constant 0 : i32
    return %arg0, %c0_i32 : i32, i32
  }
  func.func @transform_1(%arg0: i32) -> (i32, i32) {
    %c0_i32 = arith.constant 0 : i32
    %c0_i32_0 = arith.constant 0 : i32
    %c0_i32_1 = arith.constant 0 : i32
    return %c0_i32, %c0_i32_0 : i32, i32
  }
  func.func @transform_2(%arg0: i32) -> (i32, i32) {
    %c0_i32 = arith.constant 0 : i32
    %c0_i32_0 = arith.constant 0 : i32
    %c0_i32_1 = arith.constant 0 : i32
    return %c0_i32, %c0_i32_0 : i32, i32
  }
  func.func @transform_3(%arg0: i32) -> (i32, i32) {
    %c0_i32 = arith.constant 0 : i32
    %c0_i32_0 = arith.constant 0 : i32
    %c0_i32_1 = arith.constant 0 : i32
    return %c0_i32, %c0_i32_0 : i32, i32
  }
  func.func @transform_4(%arg0: i32) -> (i32, i32) {
    %c0_i32 = arith.constant 0 : i32
    %c0_i32_0 = arith.constant 0 : i32
    %c0_i32_1 = arith.constant 0 : i32
    return %c0_i32, %c0_i32_0 : i32, i32
  }
  func.func @transform_5(%arg0: i32) -> (i32, i32) {
    %c0_i32 = arith.constant 0 : i32
    %c0_i32_0 = arith.constant 0 : i32
    return %arg0, %c0_i32 : i32, i32
  }
}

</mosaic_0001>

<llo_original>
// kernel: mlp_forward.1
$region0: #{mlp_forward.1}
  #allocation0 [shape = 'u32[]', space=smem, size = 0x4, offset = 0x4, fixed_abs, tag = 'smem constant byte address 0x4 - core index']
  #allocation1 [shape = 'u32[144,128]{1,0:T(1,128)}', space=vmem, size = 0x12000, scoped, tag = 'internal scratch']
  %s0 = inlined_call_operand.vmem [shape: f32[64,32], index: 0, kind: input, shape index: {}]
  %s1 = inlined_call_operand.vmem [shape: bf16[32,128], index: 1, kind: input, shape index: {}]
  %s2 = inlined_call_operand.vmem [shape: f32[1,128], index: 2, kind: input, shape index: {}]
  %s3 = inlined_call_operand.vmem [shape: bf16[128,16], index: 3, kind: input, shape index: {}]
  %s4 = inlined_call_operand.vmem [shape: f32[1,16], index: 4, kind: input, shape index: {}]
  %s5 = inlined_call_operand.vmem [shape: f32[64,16], index: 5, kind: output, shape index: {}]
  %s6 = sld [smem:[#allocation0]]
  $region30: #{mlp_forward.1} parent=0
    _
  %s8 = ssub.s32 1, %s6
  %s9 = scalar_select 0, %s8, %s6
  // Predicated region
  $region2: #{mlp_forward.1} parent=0 // pred_check
    _
  $region3: #{mlp_forward.1} parent=0 // pred_check_branch
    %11 = sbr.rel (0) target = $region5
  $region4: #{mlp_forward.1} parent=0 // pred_region
    _
  $region5: #{mlp_forward.1} parent=0 // pred_fallthru
    _
  // Predicated region
  $region6: #{mlp_forward.1} parent=0 // pred_check
    _
  $region7: #{mlp_forward.1} parent=0 // pred_check_branch
    %13 = sbr.rel (0) target = $region9
  $region8: #{mlp_forward.1} parent=0 // pred_region
    _
  $region9: #{mlp_forward.1} parent=0 // pred_fallthru
    _
  // Predicated region
  $region10: #{mlp_forward.1} parent=0 // pred_check
    _
  $region11: #{mlp_forward.1} parent=0 // pred_check_branch
    %15 = sbr.rel (0) target = $region13
  $region12: #{mlp_forward.1} parent=0 // pred_region
    _
  $region13: #{mlp_forward.1} parent=0 // pred_fallthru
    _
  // Predicated region
  $region14: #{mlp_forward.1} parent=0 // pred_check
    _
  $region15: #{mlp_forward.1} parent=0 // pred_check_branch
    %17 = sbr.rel (0) target = $region17
  $region16: #{mlp_forward.1} parent=0 // pred_region
    _
  $region17: #{mlp_forward.1} parent=0 // pred_fallthru
    _
  // Predicated region
  $region18: #{mlp_forward.1} parent=0 // pred_check
    _
  $region19: #{mlp_forward.1} parent=0 // pred_check_branch
    %19 = sbr.rel (0) target = $region21
  $region20: #{mlp_forward.1} parent=0 // pred_region
    _
  $region21: #{mlp_forward.1} parent=0 // pred_fallthru
    _
  %v21 = vld [vmem:[%s0] sm:$0xff]
  %v22 = vld [vmem:[%s0 + $0x8] sm:$0xff]
  %v23 = vld [vmem:[%s0 + $0x10] sm:$0xff]
  %v24 = vld [vmem:[%s0 + $0x18] sm:$0xff]
  %v25 = vld [vmem:[%s0 + $0x20] sm:$0xff]
  %v26 = vld [vmem:[%s0 + $0x28] sm:$0xff]
  %v27 = vld [vmem:[%s0 + $0x30] sm:$0xff]
  %v28 = vld [vmem:[%s0 + $0x38] sm:$0xff]
  %v29 = vpack.c.bf16 %v22, %v21
  %v30 = vpack.c.bf16 %v24, %v23
  %v31 = vpack.c.bf16 %v26, %v25
  %v32 = vpack.c.bf16 %v28, %v27
  %v33 = vld [vmem:[%s1] sm:$0xf]
  %v34 = vld [vmem:[%s1 + $0x4] sm:$0xf]
  %v35 = vld [vmem:[%s1 + $0x8] sm:$0xf]
  %v36 = vld [vmem:[%s1 + $0xc] sm:$0xf]
  %v37 = vld [vmem:[%s2] sm:$0x1]
  %v39 = vlaneseq
  %v40 = vshrl.u32 %v39, 7
  %v41 = vsub.s32 0, %v40
  %v42 = vrot.slane %v37, %v41
  %v48 = vunpack.c.l.b16 %v33
  %v49 = vunpack.c.l.b16 %v34
  %v50 = vunpack.c.l.b16 %v35
  %v51 = vunpack.c.l.b16 %v36
  %v52 = vpack.c.b16 %v49, %v48
  %v53 = vpack.c.b16 %v51, %v50
  %vm56 = vcmask 261120
  %v58 = vsel %vm56, %v29, 0
  %v61 = vsel %vm56, %v30, 0
  %v64 = vsel %vm56, %v31, 0
  %v67 = vsel %vm56, %v32, 0
  %69 = vmatprep.subr.bf16.mxu0 0
  %70 = vmatpush1.bf16.msra.mxu0 0
  %71 = vmatprep.subr.bf16.mxu0 0
  %72 = vmatpush1.bf16.msra.mxu0 0
  %73 = vmatprep.subr.bf16.mxu0 0
  %74 = vmatpush1.bf16.msra.mxu0 0
  %75 = vmatprep.subr.bf16.mxu0 0
  %76 = vmatpush1.bf16.msra.mxu0 0
  %77 = vmatprep.subr.bf16.mxu0 0
  %78 = vmatpush1.bf16.msra.mxu0 0
  %79 = vmatprep.subr.bf16.mxu0 0
  %80 = vmatpush1.bf16.msra.mxu0 0
  %81 = vmatprep.subr.bf16.mxu0 0
  %82 = vmatpush1.bf16.msra.mxu0 %v53
  %83 = vmatprep.subr.bf16.mxu0 0
  %84 = vmatpush1.bf16.msra.mxu0 %v52
  %85 = vmatprep.subr.bf16.mxu0 0
  %86 = vmatpush2.bf16.msra.mxu0 0
  %87 = vmatprep.subr.bf16.mxu0 0
  %88 = vmatpush2.bf16.msra.mxu0 0
  %89 = vmatprep.subr.bf16.mxu0 0
  %90 = vmatpush2.bf16.msra.mxu0 0
  %91 = vmatprep.subr.bf16.mxu0 0
  %92 = vmatpush2.bf16.msra.mxu0 0
  %93 = vmatprep.subr.bf16.mxu0 0
  %94 = vmatpush2.bf16.msra.mxu0 0
  %95 = vmatprep.subr.bf16.mxu0 0
  %96 = vmatpush2.bf16.msra.mxu0 0
  %97 = vmatprep.subr.bf16.mxu0 0
  %98 = vmatpush2.bf16.msra.mxu0 0
  %99 = vmatprep.subr.bf16.mxu0 0
  %100 = vmatpush2.bf16.msra.mxu0 0
  %101 = vmatprep.mubr.bf16.mxu0 0
  %102 = vmatmul.mubr.bf16.gmra.mxu0 %v58
  %v103 = vpop.f32.mrf.mxu0
  %v104 = vadd.f32 %v42, %v103
  %v105 = vpop.f32.mrf.mxu0
  %v106 = vpop.f32.mrf.mxu0
  %v107 = vadd.f32 %v42, %v106
  %v108 = vpop.f32.mrf.mxu0
  %109 = vmatprep.mubr.bf16.mxu0 0
  %110 = vmatmul.mubr.bf16.gmra.mxu0 %v61
  %v111 = vpop.f32.mrf.mxu0
  %v112 = vadd.f32 %v42, %v111
  %v113 = vpop.f32.mrf.mxu0
  %v114 = vpop.f32.mrf.mxu0
  %v115 = vadd.f32 %v42, %v114
  %v116 = vpop.f32.mrf.mxu0
  %117 = vmatprep.mubr.bf16.mxu0 0
  %118 = vmatmul.mubr.bf16.gmra.mxu0 %v64
  %v119 = vpop.f32.mrf.mxu0
  %v120 = vadd.f32 %v42, %v119
  %v121 = vpop.f32.mrf.mxu0
  %v122 = vpop.f32.mrf.mxu0
  %v123 = vadd.f32 %v42, %v122
  %v124 = vpop.f32.mrf.mxu0
  %125 = vmatprep.mubr.bf16.mxu0 0
  %126 = vmatmul.mubr.bf16.gmra.mxu0 %v67
  %v127 = vpop.f32.mrf.mxu0
  %v128 = vadd.f32 %v42, %v127
  %v129 = vpop.f32.mrf.mxu0
  %v130 = vpop.f32.mrf.mxu0
  %v131 = vadd.f32 %v42, %v130
  %v132 = vpop.f32.mrf.mxu0
  %133 = vdwg.mxu0
  %v134 = vmax.f32 %v104, 0.0
  %v135 = vmax.f32 %v107, 0.0
  %v136 = vmax.f32 %v112, 0.0
  %v137 = vmax.f32 %v115, 0.0
  %v138 = vmax.f32 %v120, 0.0
  %v139 = vmax.f32 %v123, 0.0
  %v140 = vmax.f32 %v128, 0.0
  %v141 = vmax.f32 %v131, 0.0
  %v142 = vand.u32 2147483647, %v104
  %v143 = vand.u32 2147483647, %v107
  %v144 = vand.u32 2147483647, %v112
  %v145 = vand.u32 2147483647, %v115
  %v146 = vand.u32 2147483647, %v120
  %v147 = vand.u32 2147483647, %v123
  %v148 = vand.u32 2147483647, %v128
  %v149 = vand.u32 2147483647, %v131
  %v150 = vsub.f32 0.0, %v142
  %v151 = vsub.f32 0.0, %v143
  %v152 = vsub.f32 0.0, %v144
  %v153 = vsub.f32 0.0, %v145
  %v154 = vsub.f32 0.0, %v146
  %v155 = vsub.f32 0.0, %v147
  %v156 = vsub.f32 0.0, %v148
  %v157 = vsub.f32 0.0, %v149
  %v158 = vmul.f32 %v150, 1.442695
  %v159 = vpow.pop %v158
  %v160 = vmul.f32 %v151, 1.442695
  %v161 = vpow.pop %v160
  %v162 = vmul.f32 %v152, 1.442695
  %v163 = vpow.pop %v162
  %v164 = vmul.f32 %v153, 1.442695
  %v165 = vpow.pop %v164
  %v166 = vmul.f32 %v154, 1.442695
  %v167 = vpow.pop %v166
  %v168 = vmul.f32 %v155, 1.442695
  %v169 = vpow.pop %v168
  %v170 = vmul.f32 %v156, 1.442695
  %v171 = vpow.pop %v170
  %v172 = vmul.f32 %v157, 1.442695
  %v173 = vpow.pop %v172
  %v174 = vadd.f32 %v159, 1.0
  %v175 = vlog2.pop %v174
  %v176 = vmul.f32 %v175, 0.6931472
  %v177 = vmul.f32 -0.5, %v159
  %v178 = vadd.f32 %v177, 1.0
  %v179 = vmul.f32 %v178, %v159
  %v180 = vand.u32 2147483647, %v159
  %vm181 = vcmp.lt.f32.partialorder %v180, 0.0004427343
  %v182 = vsel %vm181, %v179, %v176
  %v183 = vadd.f32 %v161, 1.0
  %v184 = vlog2.pop %v183
  %v185 = vmul.f32 %v184, 0.6931472
  %v186 = vmul.f32 -0.5, %v161
  %v187 = vadd.f32 %v186, 1.0
  %v188 = vmul.f32 %v187, %v161
  %v189 = vand.u32 2147483647, %v161
  %vm190 = vcmp.lt.f32.partialorder %v189, 0.0004427343
  %v191 = vsel %vm190, %v188, %v185
  %v192 = vadd.f32 %v163, 1.0
  %v193 = vlog2.pop %v192
  %v194 = vmul.f32 %v193, 0.6931472
  %v195 = vmul.f32 -0.5, %v163
  %v196 = vadd.f32 %v195, 1.0
  %v197 = vmul.f32 %v196, %v163
  %v198 = vand.u32 2147483647, %v163
  %vm199 = vcmp.lt.f32.partialorder %v198, 0.0004427343
  %v200 = vsel %vm199, %v197, %v194
  %v201 = vadd.f32 %v165, 1.0
  %v202 = vlog2.pop %v201
  %v203 = vmul.f32 %v202, 0.6931472
  %v204 = vmul.f32 -0.5, %v165
  %v205 = vadd.f32 %v204, 1.0
  %v206 = vmul.f32 %v205, %v165
  %v207 = vand.u32 2147483647, %v165
  %vm208 = vcmp.lt.f32.partialorder %v207, 0.0004427343
  %v209 = vsel %vm208, %v206, %v203
  %v210 = vadd.f32 %v167, 1.0
  %v211 = vlog2.pop %v210
  %v212 = vmul.f32 %v211, 0.6931472
  %v213 = vmul.f32 -0.5, %v167
  %v214 = vadd.f32 %v213, 1.0
  %v215 = vmul.f32 %v214, %v167
  %v216 = vand.u32 2147483647, %v167
  %vm217 = vcmp.lt.f32.partialorder %v216, 0.0004427343
  %v218 = vsel %vm217, %v215, %v212
  %v219 = vadd.f32 %v169, 1.0
  %v220 = vlog2.pop %v219
  %v221 = vmul.f32 %v220, 0.6931472
  %v222 = vmul.f32 -0.5, %v169
  %v223 = vadd.f32 %v222, 1.0
  %v224 = vmul.f32 %v223, %v169
  %v225 = vand.u32 2147483647, %v169
  %vm226 = vcmp.lt.f32.partialorder %v225, 0.0004427343
  %v227 = vsel %vm226, %v224, %v221
  %v228 = vadd.f32 %v171, 1.0
  %v229 = vlog2.pop %v228
  %v230 = vmul.f32 %v229, 0.6931472
  %v231 = vmul.f32 -0.5, %v171
  %v232 = vadd.f32 %v231, 1.0
  %v233 = vmul.f32 %v232, %v171
  %v234 = vand.u32 2147483647, %v171
  %vm235 = vcmp.lt.f32.partialorder %v234, 0.0004427343
  %v236 = vsel %vm235, %v233, %v230
  %v237 = vadd.f32 %v173, 1.0
  %v238 = vlog2.pop %v237
  %v239 = vmul.f32 %v238, 0.6931472
  %v240 = vmul.f32 -0.5, %v173
  %v241 = vadd.f32 %v240, 1.0
  %v242 = vmul.f32 %v241, %v173
  %v243 = vand.u32 2147483647, %v173
  %vm244 = vcmp.lt.f32.partialorder %v243, 0.0004427343
  %v245 = vsel %vm244, %v242, %v239
  %v246 = vadd.f32 %v134, %v182
  %v247 = vadd.f32 %v135, %v191
  %v248 = vadd.f32 %v136, %v200
  %v249 = vadd.f32 %v137, %v209
  %v250 = vadd.f32 %v138, %v218
  %v251 = vadd.f32 %v139, %v227
  %v252 = vadd.f32 %v140, %v236
  %v253 = vadd.f32 %v141, %v245
  %v254 = vpack.c.bf16 %v247, %v246
  %v255 = vpack.c.bf16 %v249, %v248
  %v256 = vpack.c.bf16 %v251, %v250
  %v257 = vpack.c.bf16 %v253, %v252
  %v258 = vld [vmem:[%s3] sm:$0xf]
  %v259 = vld [vmem:[%s3 + $0x4] sm:$0xf]
  %v260 = vld [vmem:[%s3 + $0x8] sm:$0xf]
  %v261 = vld [vmem:[%s3 + $0xc] sm:$0xf]
  %v262 = vld [vmem:[%s3 + $0x10] sm:$0xf]
  %v263 = vld [vmem:[%s3 + $0x14] sm:$0xf]
  %v264 = vld [vmem:[%s3 + $0x18] sm:$0xf]
  %v265 = vld [vmem:[%s3 + $0x1c] sm:$0xf]
  %v266 = vld [vmem:[%s3 + $0x20] sm:$0xf]
  %v267 = vld [vmem:[%s3 + $0x24] sm:$0xf]
  %v268 = vld [vmem:[%s3 + $0x28] sm:$0xf]
  %v269 = vld [vmem:[%s3 + $0x2c] sm:$0xf]
  %v270 = vld [vmem:[%s3 + $0x30] sm:$0xf]
  %v271 = vld [vmem:[%s3 + $0x34] sm:$0xf]
  %v272 = vld [vmem:[%s3 + $0x38] sm:$0xf]
  %v273 = vld [vmem:[%s3 + $0x3c] sm:$0xf]
  %v274 = vld [vmem:[%s4] sm:$0x1]
  %v276 = vlaneseq
  %v277 = vshrl.u32 %v276, 7
  %v278 = vsub.s32 0, %v277
  %v279 = vrot.slane %v274, %v278
  %v297 = vunpack.c.l.b16 %v258
  %v298 = vunpack.c.l.b16 %v259
  %v299 = vunpack.c.l.b16 %v260
  %v300 = vunpack.c.l.b16 %v261
  %v301 = vunpack.c.l.b16 %v262
  %v302 = vunpack.c.l.b16 %v263
  %v303 = vunpack.c.l.b16 %v264
  %v304 = vunpack.c.l.b16 %v265
  %v305 = vunpack.c.l.b16 %v266
  %v306 = vunpack.c.l.b16 %v267
  %v307 = vunpack.c.l.b16 %v268
  %v308 = vunpack.c.l.b16 %v269
  %v309 = vunpack.c.l.b16 %v270
  %v310 = vunpack.c.l.b16 %v271
  %v311 = vunpack.c.l.b16 %v272
  %v312 = vunpack.c.l.b16 %v273
  %v313 = vpack.c.b16 %v298, %v297
  %v314 = vpack.c.b16 %v300, %v299
  %v315 = vpack.c.b16 %v302, %v301
  %v316 = vpack.c.b16 %v304, %v303
  %v317 = vpack.c.b16 %v306, %v305
  %v318 = vpack.c.b16 %v308, %v307
  %v319 = vpack.c.b16 %v310, %v309
  %v320 = vpack.c.b16 %v312, %v311
  %329 = vmatprep.subr.bf16.mxu0 0
  %330 = vmatpush1.bf16.msra.mxu0 %v320
  %331 = vmatprep.subr.bf16.mxu0 0
  %332 = vmatpush1.bf16.msra.mxu0 %v319
  %333 = vmatprep.subr.bf16.mxu0 0
  %334 = vmatpush1.bf16.msra.mxu0 %v318
  %335 = vmatprep.subr.bf16.mxu0 0
  %336 = vmatpush1.bf16.msra.mxu0 %v317
  %337 = vmatprep.subr.bf16.mxu0 0
  %338 = vmatpush1.bf16.msra.mxu0 %v316
  %339 = vmatprep.subr.bf16.mxu0 0
  %340 = vmatpush1.bf16.msra.mxu0 %v315
  %341 = vmatprep.subr.bf16.mxu0 0
  %342 = vmatpush1.bf16.msra.mxu0 %v314
  %343 = vmatprep.subr.bf16.mxu0 0
  %344 = vmatpush1.bf16.msra.mxu0 %v313
  %345 = vmatprep.subr.bf16.mxu0 0
  %346 = vmatpush2.bf16.msra.mxu0 0
  %347 = vmatprep.subr.bf16.mxu0 0
  %348 = vmatpush2.bf16.msra.mxu0 0
  %349 = vmatprep.subr.bf16.mxu0 0
  %350 = vmatpush2.bf16.msra.mxu0 0
  %351 = vmatprep.subr.bf16.mxu0 0
  %352 = vmatpush2.bf16.msra.mxu0 0
  %353 = vmatprep.subr.bf16.mxu0 0
  %354 = vmatpush2.bf16.msra.mxu0 0
  %355 = vmatprep.subr.bf16.mxu0 0
  %356 = vmatpush2.bf16.msra.mxu0 0
  %357 = vmatprep.subr.bf16.mxu0 0
  %358 = vmatpush2.bf16.msra.mxu0 0
  %359 = vmatprep.subr.bf16.mxu0 0
  %360 = vmatpush2.bf16.msra.mxu0 0
  %361 = vmatprep.mubr.bf16.mxu0 0
  %362 = vmatmul.mubr.bf16.gmra.mxu0 %v254
  %v363 = vpop.f32.mrf.mxu0
  %v364 = vadd.f32 %v279, %v363
  %v365 = vpop.f32.mrf.mxu0
  %v366 = vpop.f32.mrf.mxu0
  %v367 = vadd.f32 %v279, %v366
  %v368 = vpop.f32.mrf.mxu0
  %369 = vmatprep.mubr.bf16.mxu0 0
  %370 = vmatmul.mubr.bf16.gmra.mxu0 %v255
  %v371 = vpop.f32.mrf.mxu0
  %v372 = vadd.f32 %v279, %v371
  %v373 = vpop.f32.mrf.mxu0
  %v374 = vpop.f32.mrf.mxu0
  %v375 = vadd.f32 %v279, %v374
  %v376 = vpop.f32.mrf.mxu0
  %377 = vmatprep.mubr.bf16.mxu0 0
  %378 = vmatmul.mubr.bf16.gmra.mxu0 %v256
  %v379 = vpop.f32.mrf.mxu0
  %v380 = vadd.f32 %v279, %v379
  %v381 = vpop.f32.mrf.mxu0
  %v382 = vpop.f32.mrf.mxu0
  %v383 = vadd.f32 %v279, %v382
  %v384 = vpop.f32.mrf.mxu0
  %385 = vmatprep.mubr.bf16.mxu0 0
  %386 = vmatmul.mubr.bf16.gmra.mxu0 %v257
  %v387 = vpop.f32.mrf.mxu0
  %v388 = vadd.f32 %v279, %v387
  %v389 = vpop.f32.mrf.mxu0
  %v390 = vpop.f32.mrf.mxu0
  %v391 = vadd.f32 %v279, %v390
  %v392 = vpop.f32.mrf.mxu0
  %393 = vdwg.mxu0
  %vm394 = vcmask 130048
  %395 = vst.msk [vmem:[%s5] sm:$0xff] %vm394, %v364
  %396 = vst.msk [vmem:[%s5 + $0x8] sm:$0xff] %vm394, %v367
  %397 = vst.msk [vmem:[%s5 + $0x10] sm:$0xff] %vm394, %v372
  %398 = vst.msk [vmem:[%s5 + $0x18] sm:$0xff] %vm394, %v375
  %399 = vst.msk [vmem:[%s5 + $0x20] sm:$0xff] %vm394, %v380
  %400 = vst.msk [vmem:[%s5 + $0x28] sm:$0xff] %vm394, %v383
  %401 = vst.msk [vmem:[%s5 + $0x30] sm:$0xff] %vm394, %v388
  %402 = vst.msk [vmem:[%s5 + $0x38] sm:$0xff] %vm394, %v391
  // Predicated region
  $region22: #{mlp_forward.1} parent=0 // pred_check
    _
  $region23: #{mlp_forward.1} parent=0 // pred_check_branch
    %404 = sbr.rel (0) target = $region25
  $region24: #{mlp_forward.1} parent=0 // pred_region
    _
  $region25: #{mlp_forward.1} parent=0 // pred_fallthru
    _
  // Predicated region
  $region26: #{mlp_forward.1} parent=0 // pred_check
    _
  $region27: #{mlp_forward.1} parent=0 // pred_check_branch
    %406 = sbr.rel (0) target = $region29
  $region28: #{mlp_forward.1} parent=0 // pred_region
    _
  $region29: #{mlp_forward.1} parent=0 // pred_fallthru
    _

</llo_original>
